<compile_context>
chip_gen: v5e
topology: v5e:2x2
jax: 0.10.0
libtpu: 0.0.40
codegen_flags: <defaults>
</compile_context>

<pallas_src>
import functools

import jax
import jax.numpy as jnp
from jax.experimental import pallas as pl
from jax.experimental.pallas import tpu as pltpu

_SUBLANE = 8     # sublane granularity (second-to-last dim)


def _mlp_kernel(x_ref, w1_ref, b1_ref, w2_ref, b2_ref, o_ref):
    # fc1: x @ W1 + b1, then ReLU (f32 on the VPU).
    h = jnp.dot(x_ref[...], w1_ref[...],
                preferred_element_type=jnp.float32,
                precision=jax.lax.Precision.HIGHEST)
    h = jnp.maximum(h + b1_ref[...], 0.0)
    # out: h @ W2 + b2 (narrow action dim stored as-is; edge rows masked by Pallas).
    y = jnp.dot(h, w2_ref[...],
                preferred_element_type=jnp.float32,
                precision=jax.lax.Precision.HIGHEST)
    o_ref[...] = (y + b2_ref[...]).astype(o_ref.dtype)


def _round_up(n, m):
    return ((n + m - 1) // m) * m


def _cdiv(a, b):
    return -(-a // b)


def _pick_tile(B, block_b):
    """Balanced batch tile, multiple of 8 sublanes, capped at ~block_b rows."""
    n_tiles = max(1, _cdiv(B, block_b))
    # Once the batch is big enough, use an even tile count so the "parallel"
    # grid axis shards evenly across v7x's two TensorCores (e.g. B=530 ->
    # 272+258, not 512+18). Harmless single extra grid step on 1-TC v5e/v6e.
    if n_tiles % 2 and B >= 128:
        n_tiles += 1
    return _round_up(_cdiv(B, n_tiles), _SUBLANE)


@functools.partial(jax.jit, static_argnames=("block_b",))
def net_forward(x, w1, b1, w2, b2, *, block_b=8192):
    """x: (B, n_states); w1: (n_states, n_hidden); b1: (1, n_hidden);
       w2: (n_hidden, n_actions); b2: (1, n_actions) -> (B, n_actions) f32."""
    B, S = x.shape
    H = w1.shape[1]
    A = w2.shape[1]

    TB = _pick_tile(B, block_b)
    grid = (_cdiv(B, TB),)

    flops = 2 * B * (S * H + H * A)
    bytes_accessed = 4 * (B * S + S * H + H + H * A + A + B * A)

    # TODO(synk): if this net is ever deployed with wide n_states/n_hidden on
    # v6e/v7x, cast x/W1/W2 to bf16 for the MXU (keep f32 accumulation).
    return pl.pallas_call(
        _mlp_kernel,
        out_shape=jax.ShapeDtypeStruct((B, A), jnp.float32),
        grid=grid,
        in_specs=[
            pl.BlockSpec((TB, S), lambda i: (i, 0)),   # x: streamed per batch tile
            pl.BlockSpec((S, H), lambda i: (0, 0)),    # W1: VMEM-resident
            pl.BlockSpec((1, H), lambda i: (0, 0)),    # b1: VMEM-resident
            pl.BlockSpec((H, A), lambda i: (0, 0)),    # W2: VMEM-resident
            pl.BlockSpec((1, A), lambda i: (0, 0)),    # b2: VMEM-resident
        ],
        out_specs=pl.BlockSpec((TB, A), lambda i: (i, 0)),
        compiler_params=pltpu.CompilerParams(
            dimension_semantics=("parallel",),   # shard batch tiles across TCs (v7x)
        ),
        cost_estimate=pl.CostEstimate(
            flops=flops, transcendentals=0, bytes_accessed=bytes_accessed),
    )(x, w1, b1, w2, b2)


def xavier_normal(key, fan_in, fan_out):
    # matches torch.nn.init.xavier_normal_ (gain=1): std = sqrt(2 / (fan_in + fan_out))
    std = (2.0 / (fan_in + fan_out)) ** 0.5
    # returned already in [in, out] layout for the kernel
    return std * jax.random.normal(key, (fan_in, fan_out), dtype=jnp.float32)


if __name__ == "__main__":
    # Small shapes consistent with the module's forward.
    batch = 8
    n_states = 16
    n_hidden = 32
    n_actions = 4

    key = jax.random.PRNGKey(0)
    kx, kw1, kb1, kw2, kb2 = jax.random.split(key, 5)

    x = jax.random.normal(kx, (batch, n_states), dtype=jnp.float32)

    # Deterministic parameter init (xavier_normal weights; biases like PyTorch's
    # default uniform(-1/sqrt(fan_in), 1/sqrt(fan_in)), but fixed by PRNGKey(0)).
    w1 = xavier_normal(kw1, n_states, n_hidden)
    b1 = jax.random.uniform(kb1, (1, n_hidden), dtype=jnp.float32,
                            minval=-1.0 / n_states ** 0.5, maxval=1.0 / n_states ** 0.5)
    w2 = xavier_normal(kw2, n_hidden, n_actions)
    b2 = jax.random.uniform(kb2, (1, n_actions), dtype=jnp.float32,
                            minval=-1.0 / n_hidden ** 0.5, maxval=1.0 / n_hidden ** 0.5)

    out = net_forward(x, w1, b1, w2, b2)
    out = jax.block_until_ready(out)

    # Pure-JAX reference check of the same forward pass.
    ref = jnp.maximum(x @ w1 + b1, 0.0) @ w2 + b2
    assert out.shape == (batch, n_actions)
    assert jnp.allclose(out, ref, atol=1e-5, rtol=1e-5)

    # Second check: multi-tile grid + masked edge block (530 = 272 + 258 rows).
    big_b = 530
    xb = jax.random.normal(jax.random.PRNGKey(1), (big_b, n_states), dtype=jnp.float32)
    out_b = jax.block_until_ready(net_forward(xb, w1, b1, w2, b2))
    ref_b = jnp.maximum(xb @ w1 + b1, 0.0) @ w2 + b2
    assert out_b.shape == (big_b, n_actions)
    assert jnp.allclose(out_b, ref_b, atol=1e-5, rtol=1e-5)

    print("KERNEL_OK")
</pallas_src>

<mosaic_0001>
module attributes {stable_mosaic.version = 11 : i64} {
  func.func @_mlp_kernel(%arg0: i32, %arg1: memref<8x16xf32, #tpu.memory_space<vmem>>, %arg2: memref<16x32xf32, #tpu.memory_space<vmem>>, %arg3: memref<1x32xf32, #tpu.memory_space<vmem>>, %arg4: memref<32x4xf32, #tpu.memory_space<vmem>>, %arg5: memref<1x4xf32, #tpu.memory_space<vmem>>, %arg6: memref<8x4xf32, #tpu.memory_space<vmem>>) attributes {dimension_semantics = [#tpu.dimension_semantics<parallel>], iteration_bounds = array<i64: 1>, scalar_prefetch = 0 : i64, scratch_operands = 0 : i64, tpu.core_type = #tpu.core_type<tc>, window_params = [{transform_indices = @transform_0, window_bounds = array<i64: 8, 16>}, {pipeline_mode = #tpu.pipeline_mode<synchronous>, transform_indices = @transform_1, window_bounds = array<i64: 16, 32>}, {pipeline_mode = #tpu.pipeline_mode<synchronous>, transform_indices = @transform_2, window_bounds = array<i64: 1, 32>}, {pipeline_mode = #tpu.pipeline_mode<synchronous>, transform_indices = @transform_3, window_bounds = array<i64: 32, 4>}, {pipeline_mode = #tpu.pipeline_mode<synchronous>, transform_indices = @transform_4, window_bounds = array<i64: 1, 4>}, {transform_indices = @transform_5, window_bounds = array<i64: 8, 4>}]} {
    %c0 = arith.constant 0 : index
    %c0_0 = arith.constant 0 : index
    %0 = vector.load %arg1[%c0, %c0_0] : memref<8x16xf32, #tpu.memory_space<vmem>>, vector<8x16xf32>
    %c0_1 = arith.constant 0 : index
    %c0_2 = arith.constant 0 : index
    %1 = vector.load %arg2[%c0_1, %c0_2] : memref<16x32xf32, #tpu.memory_space<vmem>>, vector<16x32xf32>
    %cst = arith.constant dense<0.000000e+00> : vector<8x32xf32>
    %2 = tpu.matmul %0, %1, %cst {dimension_numbers = #tpu.dot_dimension_numbers<[1], [0], [0], [1], [0, 0, 1, 1], [], []>, precision = #tpu.contract_precision<fp32>} : vector<8x16xf32>, vector<16x32xf32>, vector<8x32xf32> -> vector<8x32xf32>
    %c0_3 = arith.constant 0 : index
    %c0_4 = arith.constant 0 : index
    %3 = vector.load %arg3[%c0_3, %c0_4] : memref<1x32xf32, #tpu.memory_space<vmem>>, vector<1x32xf32>
    %4 = vector.broadcast %3 : vector<1x32xf32> to vector<8x32xf32>
    %5 = arith.addf %2, %4 : vector<8x32xf32>
    %cst_5 = arith.constant 0.000000e+00 : f32
    %6 = vector.broadcast %cst_5 : f32 to vector<8x32xf32>
    %7 = arith.maximumf %5, %6 : vector<8x32xf32>
    %c0_6 = arith.constant 0 : index
    %c0_7 = arith.constant 0 : index
    %8 = vector.load %arg4[%c0_6, %c0_7] : memref<32x4xf32, #tpu.memory_space<vmem>>, vector<32x4xf32>
    %cst_8 = arith.constant dense<0.000000e+00> : vector<8x4xf32>
    %9 = tpu.matmul %7, %8, %cst_8 {dimension_numbers = #tpu.dot_dimension_numbers<[1], [0], [0], [1], [0, 0, 1, 1], [], []>, precision = #tpu.contract_precision<fp32>} : vector<8x32xf32>, vector<32x4xf32>, vector<8x4xf32> -> vector<8x4xf32>
    %c0_9 = arith.constant 0 : index
    %c0_10 = arith.constant 0 : index
    %10 = vector.load %arg5[%c0_9, %c0_10] : memref<1x4xf32, #tpu.memory_space<vmem>>, vector<1x4xf32>
    %11 = vector.broadcast %10 : vector<1x4xf32> to vector<8x4xf32>
    %12 = arith.addf %9, %11 : vector<8x4xf32>
    %c0_11 = arith.constant 0 : index
    %c0_12 = arith.constant 0 : index
    %13 = vector.load %arg6[%c0_11, %c0_12] : memref<8x4xf32, #tpu.memory_space<vmem>>, vector<8x4xf32>
    tpu.vector_store %arg6[%c0_11, %c0_12], %12 {strides = array<i32>} : memref<8x4xf32, #tpu.memory_space<vmem>>, vector<8x4xf32>,
    return
  }
  func.func @transform_0(%arg0: i32) -> (i32, i32) {
    %c0_i32 = arith.constant 0 : i32
    %c0_i32_0 = arith.constant 0 : i32
    return %arg0, %c0_i32 : i32, i32
  }
  func.func @transform_1(%arg0: i32) -> (i32, i32) {
    %c0_i32 = arith.constant 0 : i32
    %c0_i32_0 = arith.constant 0 : i32
    %c0_i32_1 = arith.constant 0 : i32
    return %c0_i32, %c0_i32_0 : i32, i32
  }
  func.func @transform_2(%arg0: i32) -> (i32, i32) {
    %c0_i32 = arith.constant 0 : i32
    %c0_i32_0 = arith.constant 0 : i32
    %c0_i32_1 = arith.constant 0 : i32
    return %c0_i32, %c0_i32_0 : i32, i32
  }
  func.func @transform_3(%arg0: i32) -> (i32, i32) {
    %c0_i32 = arith.constant 0 : i32
    %c0_i32_0 = arith.constant 0 : i32
    %c0_i32_1 = arith.constant 0 : i32
    return %c0_i32, %c0_i32_0 : i32, i32
  }
  func.func @transform_4(%arg0: i32) -> (i32, i32) {
    %c0_i32 = arith.constant 0 : i32
    %c0_i32_0 = arith.constant 0 : i32
    %c0_i32_1 = arith.constant 0 : i32
    return %c0_i32, %c0_i32_0 : i32, i32
  }
  func.func @transform_5(%arg0: i32) -> (i32, i32) {
    %c0_i32 = arith.constant 0 : i32
    %c0_i32_0 = arith.constant 0 : i32
    return %arg0, %c0_i32 : i32, i32
  }
}

</mosaic_0001>

<llo_original>
// kernel: net_forward.1
$region0: #{net_forward.1}
  #allocation0 [shape = 'u32[]', space=smem, size = 0x4, offset = 0x4, fixed_abs, tag = 'smem constant byte address 0x4 - core index']
  #allocation1 [shape = 'u32[72,128]{1,0:T(1,128)}', space=vmem, size = 0x9000, scoped, tag = 'internal scratch']
  %s0 = inlined_call_operand.vmem [shape: f32[8,16], index: 0, kind: input, shape index: {}]
  %s1 = inlined_call_operand.vmem [shape: f32[16,32], index: 1, kind: input, shape index: {}]
  %s2 = inlined_call_operand.vmem [shape: f32[1,32], index: 2, kind: input, shape index: {}]
  %s3 = inlined_call_operand.vmem [shape: f32[32,4], index: 3, kind: input, shape index: {}]
  %s4 = inlined_call_operand.vmem [shape: f32[1,4], index: 4, kind: input, shape index: {}]
  %s5 = inlined_call_operand.vmem [shape: f32[8,4], index: 5, kind: output, shape index: {}]
  %s6 = sld [smem:[#allocation0]]
  $region30: #{net_forward.1} parent=0
    _
  %s8 = ssub.s32 1, %s6
  %s9 = scalar_select 0, %s8, %s6
  // Predicated region
  $region2: #{net_forward.1} parent=0 // pred_check
    _
  $region3: #{net_forward.1} parent=0 // pred_check_branch
    %11 = sbr.rel (0) target = $region5
  $region4: #{net_forward.1} parent=0 // pred_region
    _
  $region5: #{net_forward.1} parent=0 // pred_fallthru
    _
  // Predicated region
  $region6: #{net_forward.1} parent=0 // pred_check
    _
  $region7: #{net_forward.1} parent=0 // pred_check_branch
    %13 = sbr.rel (0) target = $region9
  $region8: #{net_forward.1} parent=0 // pred_region
    _
  $region9: #{net_forward.1} parent=0 // pred_fallthru
    _
  // Predicated region
  $region10: #{net_forward.1} parent=0 // pred_check
    _
  $region11: #{net_forward.1} parent=0 // pred_check_branch
    %15 = sbr.rel (0) target = $region13
  $region12: #{net_forward.1} parent=0 // pred_region
    _
  $region13: #{net_forward.1} parent=0 // pred_fallthru
    _
  // Predicated region
  $region14: #{net_forward.1} parent=0 // pred_check
    _
  $region15: #{net_forward.1} parent=0 // pred_check_branch
    %17 = sbr.rel (0) target = $region17
  $region16: #{net_forward.1} parent=0 // pred_region
    _
  $region17: #{net_forward.1} parent=0 // pred_fallthru
    _
  // Predicated region
  $region18: #{net_forward.1} parent=0 // pred_check
    _
  $region19: #{net_forward.1} parent=0 // pred_check_branch
    %19 = sbr.rel (0) target = $region21
  $region20: #{net_forward.1} parent=0 // pred_region
    _
  $region21: #{net_forward.1} parent=0 // pred_fallthru
    _
  %v20 = vld [vmem:[%s0] sm:$0xff]
  %v21 = vld [vmem:[%s1] sm:$0xff]
  %v22 = vld [vmem:[%s1 + $0x8] sm:$0xff]
  %v23 = vld [vmem:[%s2] sm:$0x1]
  %v25 = vperm.slane %v23, 0
  %vm27 = vcmask 130048
  %v29 = vsel %vm27, %v20, 0
  %31 = vmatpush.msra.mxu0 0.0
  %32 = vmatpush.msra.mxu0 0.0
  %33 = vmatpush.msra.mxu0 0.0
  %34 = vmatpush.msra.mxu0 0.0
  %35 = vmatpush.msra.mxu0 0.0
  %36 = vmatpush.msra.mxu0 0.0
  %37 = vmatpush.msra.mxu0 0.0
  %38 = vmatpush.msra.mxu0 0.0
  %39 = vmatpush.msra.mxu0 0.0
  %40 = vmatpush.msra.mxu0 0.0
  %41 = vmatpush.msra.mxu0 0.0
  %42 = vmatpush.msra.mxu0 0.0
  %43 = vmatpush.msra.mxu0 0.0
  %44 = vmatpush.msra.mxu0 0.0
  %v45 = vand.u32 %v22, 4294901760
  %46 = vmatpush.msra.mxu0 %v45
  %v47 = vand.u32 %v21, 4294901760
  %48 = vmatpush.msra.mxu0 %v47
  %v49 = vand.u32 %v29, 4294901760
  %v50 = vsub.f32 %v29, %v49
  %v51 = vand.u32 %v50, 4294901760
  %v52 = vsub.f32 %v50, %v51
  %v53 = vand.u32 %v52, 4294901760
  %54 = vmatmul.f32.gmra.mxu0 %v53
  %v55 = vpop.f32.mrf.mxu0
  %v56 = vadd.f32 %v25, %v55
  %57 = vdwg.mxu0
  %58 = vmatpush.msra.mxu0 0.0
  %59 = vmatpush.msra.mxu0 0.0
  %60 = vmatpush.msra.mxu0 0.0
  %61 = vmatpush.msra.mxu0 0.0
  %62 = vmatpush.msra.mxu0 0.0
  %63 = vmatpush.msra.mxu0 0.0
  %64 = vmatpush.msra.mxu0 0.0
  %65 = vmatpush.msra.mxu0 0.0
  %66 = vmatpush.msra.mxu0 0.0
  %67 = vmatpush.msra.mxu0 0.0
  %68 = vmatpush.msra.mxu0 0.0
  %69 = vmatpush.msra.mxu0 0.0
  %70 = vmatpush.msra.mxu0 0.0
  %71 = vmatpush.msra.mxu0 0.0
  %v72 = vand.u32 %v22, 4294901760
  %v73 = vsub.f32 %v22, %v72
  %v74 = vand.u32 %v73, 4294901760
  %v75 = vsub.f32 %v73, %v74
  %v76 = vand.u32 %v75, 4294901760
  %77 = vmatpush.msra.mxu0 %v76
  %v78 = vand.u32 %v21, 4294901760
  %v79 = vsub.f32 %v21, %v78
  %v80 = vand.u32 %v79, 4294901760
  %v81 = vsub.f32 %v79, %v80
  %v82 = vand.u32 %v81, 4294901760
  %83 = vmatpush.msra.mxu0 %v82
  %v84 = vand.u32 %v29, 4294901760
  %85 = vmatmul.f32.gmra.mxu0 %v84
  %v86 = vpop.f32.mrf.mxu0
  %v87 = vadd.f32 %v56, %v86
  %88 = vdwg.mxu0
  %89 = vmatpush.msra.mxu0 0.0
  %90 = vmatpush.msra.mxu0 0.0
  %91 = vmatpush.msra.mxu0 0.0
  %92 = vmatpush.msra.mxu0 0.0
  %93 = vmatpush.msra.mxu0 0.0
  %94 = vmatpush.msra.mxu0 0.0
  %95 = vmatpush.msra.mxu0 0.0
  %96 = vmatpush.msra.mxu0 0.0
  %97 = vmatpush.msra.mxu0 0.0
  %98 = vmatpush.msra.mxu0 0.0
  %99 = vmatpush.msra.mxu0 0.0
  %100 = vmatpush.msra.mxu0 0.0
  %101 = vmatpush.msra.mxu0 0.0
  %102 = vmatpush.msra.mxu0 0.0
  %v103 = vand.u32 %v22, 4294901760
  %v104 = vsub.f32 %v22, %v103
  %105 = vmatpush.msra.mxu0 %v104
  %v106 = vand.u32 %v21, 4294901760
  %v107 = vsub.f32 %v21, %v106
  %108 = vmatpush.msra.mxu0 %v107
  %v109 = vand.u32 %v29, 4294901760
  %v110 = vsub.f32 %v29, %v109
  %111 = vmatmul.f32.gmra.mxu0 %v110
  %v112 = vpop.f32.mrf.mxu0
  %v113 = vadd.f32 %v87, %v112
  %114 = vdwg.mxu0
  %115 = vmatpush.msra.mxu0 0.0
  %116 = vmatpush.msra.mxu0 0.0
  %117 = vmatpush.msra.mxu0 0.0
  %118 = vmatpush.msra.mxu0 0.0
  %119 = vmatpush.msra.mxu0 0.0
  %120 = vmatpush.msra.mxu0 0.0
  %121 = vmatpush.msra.mxu0 0.0
  %122 = vmatpush.msra.mxu0 0.0
  %123 = vmatpush.msra.mxu0 0.0
  %124 = vmatpush.msra.mxu0 0.0
  %125 = vmatpush.msra.mxu0 0.0
  %126 = vmatpush.msra.mxu0 0.0
  %127 = vmatpush.msra.mxu0 0.0
  %128 = vmatpush.msra.mxu0 0.0
  %v129 = vand.u32 %v22, 4294901760
  %130 = vmatpush.msra.mxu0 %v129
  %v131 = vand.u32 %v21, 4294901760
  %132 = vmatpush.msra.mxu0 %v131
  %v133 = vand.u32 %v29, 4294901760
  %v134 = vsub.f32 %v29, %v133
  %v135 = vand.u32 %v134, 4294901760
  %136 = vmatmul.f32.gmra.mxu0 %v135
  %v137 = vpop.f32.mrf.mxu0
  %v138 = vadd.f32 %v113, %v137
  %139 = vdwg.mxu0
  %140 = vmatpush.msra.mxu0 0.0
  %141 = vmatpush.msra.mxu0 0.0
  %142 = vmatpush.msra.mxu0 0.0
  %143 = vmatpush.msra.mxu0 0.0
  %144 = vmatpush.msra.mxu0 0.0
  %145 = vmatpush.msra.mxu0 0.0
  %146 = vmatpush.msra.mxu0 0.0
  %147 = vmatpush.msra.mxu0 0.0
  %148 = vmatpush.msra.mxu0 0.0
  %149 = vmatpush.msra.mxu0 0.0
  %150 = vmatpush.msra.mxu0 0.0
  %151 = vmatpush.msra.mxu0 0.0
  %152 = vmatpush.msra.mxu0 0.0
  %153 = vmatpush.msra.mxu0 0.0
  %v154 = vand.u32 %v22, 4294901760
  %v155 = vsub.f32 %v22, %v154
  %v156 = vand.u32 %v155, 4294901760
  %157 = vmatpush.msra.mxu0 %v156
  %v158 = vand.u32 %v21, 4294901760
  %v159 = vsub.f32 %v21, %v158
  %v160 = vand.u32 %v159, 4294901760
  %161 = vmatpush.msra.mxu0 %v160
  %v162 = vand.u32 %v29, 4294901760
  %163 = vmatmul.f32.gmra.mxu0 %v162
  %v164 = vpop.f32.mrf.mxu0
  %v165 = vadd.f32 %v138, %v164
  %166 = vdwg.mxu0
  %167 = vmatpush.msra.mxu0 0.0
  %168 = vmatpush.msra.mxu0 0.0
  %169 = vmatpush.msra.mxu0 0.0
  %170 = vmatpush.msra.mxu0 0.0
  %171 = vmatpush.msra.mxu0 0.0
  %172 = vmatpush.msra.mxu0 0.0
  %173 = vmatpush.msra.mxu0 0.0
  %174 = vmatpush.msra.mxu0 0.0
  %175 = vmatpush.msra.mxu0 0.0
  %176 = vmatpush.msra.mxu0 0.0
  %177 = vmatpush.msra.mxu0 0.0
  %178 = vmatpush.msra.mxu0 0.0
  %179 = vmatpush.msra.mxu0 0.0
  %180 = vmatpush.msra.mxu0 0.0
  %v181 = vand.u32 %v22, 4294901760
  %182 = vmatpush.msra.mxu0 %v181
  %v183 = vand.u32 %v21, 4294901760
  %184 = vmatpush.msra.mxu0 %v183
  %v185 = vand.u32 %v29, 4294901760
  %186 = vmatmul.f32.gmra.mxu0 %v185
  %v187 = vpop.f32.mrf.mxu0
  %v188 = vadd.f32 %v165, %v187
  %189 = vdwg.mxu0
  %v190 = vmax.f32 %v188, 0.0
  %v191 = vld [vmem:[%s3] sm:$0xff]
  %v192 = vld [vmem:[%s3 + $0x8] sm:$0xff]
  %v193 = vld [vmem:[%s3 + $0x10] sm:$0xff]
  %v194 = vld [vmem:[%s3 + $0x18] sm:$0xff]
  %v195 = vld [vmem:[%s4] sm:$0x1]
  %v197 = vperm.slane %v195, 0
  %vm199 = vcmask 261120
  %v201 = vsel %vm199, %v190, 0
  %203 = vmatpush.msra.mxu0 0.0
  %204 = vmatpush.msra.mxu0 0.0
  %205 = vmatpush.msra.mxu0 0.0
  %206 = vmatpush.msra.mxu0 0.0
  %207 = vmatpush.msra.mxu0 0.0
  %208 = vmatpush.msra.mxu0 0.0
  %209 = vmatpush.msra.mxu0 0.0
  %210 = vmatpush.msra.mxu0 0.0
  %211 = vmatpush.msra.mxu0 0.0
  %212 = vmatpush.msra.mxu0 0.0
  %213 = vmatpush.msra.mxu0 0.0
  %214 = vmatpush.msra.mxu0 0.0
  %v215 = vand.u32 %v194, 4294901760
  %216 = vmatpush.msra.mxu0 %v215
  %v217 = vand.u32 %v193, 4294901760
  %218 = vmatpush.msra.mxu0 %v217
  %v219 = vand.u32 %v192, 4294901760
  %220 = vmatpush.msra.mxu0 %v219
  %v221 = vand.u32 %v191, 4294901760
  %222 = vmatpush.msra.mxu0 %v221
  %v223 = vand.u32 %v201, 4294901760
  %v224 = vsub.f32 %v201, %v223
  %v225 = vand.u32 %v224, 4294901760
  %v226 = vsub.f32 %v224, %v225
  %v227 = vand.u32 %v226, 4294901760
  %228 = vmatmul.f32.gmra.mxu0 %v227
  %v229 = vpop.f32.mrf.mxu0
  %v230 = vadd.f32 %v197, %v229
  %231 = vdwg.mxu0
  %232 = vmatpush.msra.mxu0 0.0
  %233 = vmatpush.msra.mxu0 0.0
  %234 = vmatpush.msra.mxu0 0.0
  %235 = vmatpush.msra.mxu0 0.0
  %236 = vmatpush.msra.mxu0 0.0
  %237 = vmatpush.msra.mxu0 0.0
  %238 = vmatpush.msra.mxu0 0.0
  %239 = vmatpush.msra.mxu0 0.0
  %240 = vmatpush.msra.mxu0 0.0
  %241 = vmatpush.msra.mxu0 0.0
  %242 = vmatpush.msra.mxu0 0.0
  %243 = vmatpush.msra.mxu0 0.0
  %v244 = vand.u32 %v194, 4294901760
  %v245 = vsub.f32 %v194, %v244
  %v246 = vand.u32 %v245, 4294901760
  %v247 = vsub.f32 %v245, %v246
  %v248 = vand.u32 %v247, 4294901760
  %249 = vmatpush.msra.mxu0 %v248
  %v250 = vand.u32 %v193, 4294901760
  %v251 = vsub.f32 %v193, %v250
  %v252 = vand.u32 %v251, 4294901760
  %v253 = vsub.f32 %v251, %v252
  %v254 = vand.u32 %v253, 4294901760
  %255 = vmatpush.msra.mxu0 %v254
  %v256 = vand.u32 %v192, 4294901760
  %v257 = vsub.f32 %v192, %v256
  %v258 = vand.u32 %v257, 4294901760
  %v259 = vsub.f32 %v257, %v258
  %v260 = vand.u32 %v259, 4294901760
  %261 = vmatpush.msra.mxu0 %v260
  %v262 = vand.u32 %v191, 4294901760
  %v263 = vsub.f32 %v191, %v262
  %v264 = vand.u32 %v263, 4294901760
  %v265 = vsub.f32 %v263, %v264
  %v266 = vand.u32 %v265, 4294901760
  %267 = vmatpush.msra.mxu0 %v266
  %v268 = vand.u32 %v201, 4294901760
  %269 = vmatmul.f32.gmra.mxu0 %v268
  %v270 = vpop.f32.mrf.mxu0
  %v271 = vadd.f32 %v230, %v270
  %272 = vdwg.mxu0
  %273 = vmatpush.msra.mxu0 0.0
  %274 = vmatpush.msra.mxu0 0.0
  %275 = vmatpush.msra.mxu0 0.0
  %276 = vmatpush.msra.mxu0 0.0
  %277 = vmatpush.msra.mxu0 0.0
  %278 = vmatpush.msra.mxu0 0.0
  %279 = vmatpush.msra.mxu0 0.0
  %280 = vmatpush.msra.mxu0 0.0
  %281 = vmatpush.msra.mxu0 0.0
  %282 = vmatpush.msra.mxu0 0.0
  %283 = vmatpush.msra.mxu0 0.0
  %284 = vmatpush.msra.mxu0 0.0
  %v285 = vand.u32 %v194, 4294901760
  %v286 = vsub.f32 %v194, %v285
  %287 = vmatpush.msra.mxu0 %v286
  %v288 = vand.u32 %v193, 4294901760
  %v289 = vsub.f32 %v193, %v288
  %290 = vmatpush.msra.mxu0 %v289
  %v291 = vand.u32 %v192, 4294901760
  %v292 = vsub.f32 %v192, %v291
  %293 = vmatpush.msra.mxu0 %v292
  %v294 = vand.u32 %v191, 4294901760
  %v295 = vsub.f32 %v191, %v294
  %296 = vmatpush.msra.mxu0 %v295
  %v297 = vand.u32 %v201, 4294901760
  %v298 = vsub.f32 %v201, %v297
  %299 = vmatmul.f32.gmra.mxu0 %v298
  %v300 = vpop.f32.mrf.mxu0
  %v301 = vadd.f32 %v271, %v300
  %302 = vdwg.mxu0
  %303 = vmatpush.msra.mxu0 0.0
  %304 = vmatpush.msra.mxu0 0.0
  %305 = vmatpush.msra.mxu0 0.0
  %306 = vmatpush.msra.mxu0 0.0
  %307 = vmatpush.msra.mxu0 0.0
  %308 = vmatpush.msra.mxu0 0.0
  %309 = vmatpush.msra.mxu0 0.0
  %310 = vmatpush.msra.mxu0 0.0
  %311 = vmatpush.msra.mxu0 0.0
  %312 = vmatpush.msra.mxu0 0.0
  %313 = vmatpush.msra.mxu0 0.0
  %314 = vmatpush.msra.mxu0 0.0
  %v315 = vand.u32 %v194, 4294901760
  %316 = vmatpush.msra.mxu0 %v315
  %v317 = vand.u32 %v193, 4294901760
  %318 = vmatpush.msra.mxu0 %v317
  %v319 = vand.u32 %v192, 4294901760
  %320 = vmatpush.msra.mxu0 %v319
  %v321 = vand.u32 %v191, 4294901760
  %322 = vmatpush.msra.mxu0 %v321
  %v323 = vand.u32 %v201, 4294901760
  %v324 = vsub.f32 %v201, %v323
  %v325 = vand.u32 %v324, 4294901760
  %326 = vmatmul.f32.gmra.mxu0 %v325
  %v327 = vpop.f32.mrf.mxu0
  %v328 = vadd.f32 %v301, %v327
  %329 = vdwg.mxu0
  %330 = vmatpush.msra.mxu0 0.0
  %331 = vmatpush.msra.mxu0 0.0
  %332 = vmatpush.msra.mxu0 0.0
  %333 = vmatpush.msra.mxu0 0.0
  %334 = vmatpush.msra.mxu0 0.0
  %335 = vmatpush.msra.mxu0 0.0
  %336 = vmatpush.msra.mxu0 0.0
  %337 = vmatpush.msra.mxu0 0.0
  %338 = vmatpush.msra.mxu0 0.0
  %339 = vmatpush.msra.mxu0 0.0
  %340 = vmatpush.msra.mxu0 0.0
  %341 = vmatpush.msra.mxu0 0.0
  %v342 = vand.u32 %v194, 4294901760
  %v343 = vsub.f32 %v194, %v342
  %v344 = vand.u32 %v343, 4294901760
  %345 = vmatpush.msra.mxu0 %v344
  %v346 = vand.u32 %v193, 4294901760
  %v347 = vsub.f32 %v193, %v346
  %v348 = vand.u32 %v347, 4294901760
  %349 = vmatpush.msra.mxu0 %v348
  %v350 = vand.u32 %v192, 4294901760
  %v351 = vsub.f32 %v192, %v350
  %v352 = vand.u32 %v351, 4294901760
  %353 = vmatpush.msra.mxu0 %v352
  %v354 = vand.u32 %v191, 4294901760
  %v355 = vsub.f32 %v191, %v354
  %v356 = vand.u32 %v355, 4294901760
  %357 = vmatpush.msra.mxu0 %v356
  %v358 = vand.u32 %v201, 4294901760
  %359 = vmatmul.f32.gmra.mxu0 %v358
  %v360 = vpop.f32.mrf.mxu0
  %v361 = vadd.f32 %v328, %v360
  %362 = vdwg.mxu0
  %363 = vmatpush.msra.mxu0 0.0
  %364 = vmatpush.msra.mxu0 0.0
  %365 = vmatpush.msra.mxu0 0.0
  %366 = vmatpush.msra.mxu0 0.0
  %367 = vmatpush.msra.mxu0 0.0
  %368 = vmatpush.msra.mxu0 0.0
  %369 = vmatpush.msra.mxu0 0.0
  %370 = vmatpush.msra.mxu0 0.0
  %371 = vmatpush.msra.mxu0 0.0
  %372 = vmatpush.msra.mxu0 0.0
  %373 = vmatpush.msra.mxu0 0.0
  %374 = vmatpush.msra.mxu0 0.0
  %v375 = vand.u32 %v194, 4294901760
  %376 = vmatpush.msra.mxu0 %v375
  %v377 = vand.u32 %v193, 4294901760
  %378 = vmatpush.msra.mxu0 %v377
  %v379 = vand.u32 %v192, 4294901760
  %380 = vmatpush.msra.mxu0 %v379
  %v381 = vand.u32 %v191, 4294901760
  %382 = vmatpush.msra.mxu0 %v381
  %v383 = vand.u32 %v201, 4294901760
  %384 = vmatmul.f32.gmra.mxu0 %v383
  %v385 = vpop.f32.mrf.mxu0
  %v386 = vadd.f32 %v361, %v385
  %387 = vdwg.mxu0
  %vm388 = vcmask 31744
  %389 = vst.msk [vmem:[%s5] sm:$0xff] %vm388, %v386
  // Predicated region
  $region22: #{net_forward.1} parent=0 // pred_check
    _
  $region23: #{net_forward.1} parent=0 // pred_check_branch
    %391 = sbr.rel (0) target = $region25
  $region24: #{net_forward.1} parent=0 // pred_region
    _
  $region25: #{net_forward.1} parent=0 // pred_fallthru
    _
  // Predicated region
  $region26: #{net_forward.1} parent=0 // pred_check
    _
  $region27: #{net_forward.1} parent=0 // pred_check_branch
    %393 = sbr.rel (0) target = $region29
  $region28: #{net_forward.1} parent=0 // pred_region
    _
  $region29: #{net_forward.1} parent=0 // pred_fallthru
    _

</llo_original>
